<compile_context>
chip_gen: v7x
topology: tpu7x:2x2x1
jax: 0.10.0
libtpu: 0.0.40
codegen_flags: <defaults>
</compile_context>

<pallas_src>
import jax
import jax.numpy as jnp
import numpy as np
from jax.experimental import pallas as pl
from jax.experimental.pallas import tpu as pltpu

HIDDEN = 128


def _round_up(n, m):
    return (n + m - 1) // m * m


# ---------------------------------------------------------------------------
# Kernel
# ---------------------------------------------------------------------------
def qnet_kernel(x_ref, w1_ref, b1_ref, w2_ref, b2_ref, w3_ref, b3_ref, o_ref):
    # Three MXU matmuls (bf16 inputs, f32 accumulation) + two VPU ReLUs.
    x = x_ref[...]                                   # [tm, in_pad]  (bf16)
    wdt = w1_ref.dtype

    h1 = jnp.dot(x, w1_ref[...], preferred_element_type=jnp.float32)
    h1 = jnp.maximum(h1 + b1_ref[...], 0.0)          # f32 bias/ReLU

    h2 = jnp.dot(h1.astype(wdt), w2_ref[...], preferred_element_type=jnp.float32)
    h2 = jnp.maximum(h2 + b2_ref[...], 0.0)          # f32 bias/ReLU

    out = jnp.dot(h2.astype(wdt), w3_ref[...], preferred_element_type=jnp.float32)
    o_ref[...] = (out + b3_ref[...]).astype(o_ref.dtype)   # lane-dense [tm, 128] store


# ---------------------------------------------------------------------------
# Parameter handling
# ---------------------------------------------------------------------------
def init_qnet_params(key, input_size, output_size, hidden=HIDDEN):
    """Logical f32 params mimicking PyTorch nn.Linear default init.
    w: [in_features, out_features], b: [1, out_features]."""
    ks = jax.random.split(key, 6)

    def linear(kw, kb, fan_in, fan_out):
        bound = 1.0 / np.sqrt(fan_in)
        w = jax.random.uniform(kw, (fan_in, fan_out), jnp.float32, -bound, bound)
        b = jax.random.uniform(kb, (1, fan_out), jnp.float32, -bound, bound)
        return w, b

    w1, b1 = linear(ks[0], ks[1], input_size, hidden)
    w2, b2 = linear(ks[2], ks[3], hidden, hidden)
    w3, b3 = linear(ks[4], ks[5], hidden, output_size)
    return {"w1": w1, "b1": b1, "w2": w2, "b2": b2, "w3": w3, "b3": b3}


def pack_qnet_params(p, weight_dtype=jnp.bfloat16):
    """Pad to TPU-friendly shapes and cast weights to bf16 (biases stay f32).

    - input dim padded to a multiple of 8 (sublane-aligned first contraction)
    - output dim padded to a multiple of 128 (lane-dense output stores)
    Zero padding preserves forward semantics exactly.
    """
    in_size = p["w1"].shape[0]
    out_size = p["w3"].shape[1]
    in_pad = max(_round_up(in_size, 8), 8)
    out_pad = max(_round_up(out_size, 128), 128)

    w1 = jnp.zeros((in_pad, HIDDEN), jnp.float32).at[:in_size, :].set(p["w1"])
    w3 = jnp.zeros((HIDDEN, out_pad), jnp.float32).at[:, :out_size].set(p["w3"])
    b3 = jnp.zeros((1, out_pad), jnp.float32).at[:, :out_size].set(p["b3"])

    return {
        "w1": w1.astype(weight_dtype),
        "b1": p["b1"].astype(jnp.float32),
        "w2": p["w2"].astype(weight_dtype),
        "b2": p["b2"].astype(jnp.float32),
        "w3": w3.astype(weight_dtype),
        "b3": b3,
        "in_size": in_size,
        "in_pad": in_pad,
        "out_size": out_size,
        "out_pad": out_pad,
    }


# ---------------------------------------------------------------------------
# Wrapper
# ---------------------------------------------------------------------------
def qnet_forward(x, packed, *, tm_max=512):
    """x: [B, input_size] f32 -> [B, output_size] f32."""
    B, in_size = x.shape
    assert in_size == packed["in_size"]
    in_pad, out_pad, out_size = packed["in_pad"], packed["out_pad"], packed["out_size"]
    wdt = packed["w1"].dtype

    # Batch tile: >= 256 rows at replay-batch sizes (keeps the 256-wide MXU on
    # v6e/v7x fed); one whole (8-aligned) tile for small batches.
    tm = tm_max if B >= tm_max else max(_round_up(B, 8), 8)
    B_pad = _round_up(B, tm)
    grid = (B_pad // tm,)

    # Pad + cast x once in the wrapper (rows beyond B are zeros -> discarded).
    xp = jnp.zeros((B_pad, in_pad), wdt).at[:B, :in_size].set(x.astype(wdt))

    weight_keys = ("w1", "b1", "w2", "b2", "w3", "b3")
    flops = 2 * B_pad * (in_pad * HIDDEN + HIDDEN * HIDDEN + HIDDEN * out_pad)
    bytes_accessed = (
        xp.size * xp.dtype.itemsize
        + sum(packed[k].size * packed[k].dtype.itemsize for k in weight_keys)
        + B_pad * out_pad * 4
    )

    # Grid-invariant specs: weights/biases DMA'd once, resident in VMEM.
    def resident(a):
        return pl.BlockSpec(a.shape, lambda i: (0,) * a.ndim)

    out_padded = pl.pallas_call(
        qnet_kernel,
        out_shape=jax.ShapeDtypeStruct((B_pad, out_pad), jnp.float32),
        grid=grid,
        in_specs=[
            pl.BlockSpec((tm, in_pad), lambda i: (i, 0)),   # x: streamed per tile
            resident(packed["w1"]),
            resident(packed["b1"]),
            resident(packed["w2"]),
            resident(packed["b2"]),
            resident(packed["w3"]),
            resident(packed["b3"]),
        ],
        out_specs=pl.BlockSpec((tm, out_pad), lambda i: (i, 0)),
        compiler_params=pltpu.CompilerParams(
            # Batch tiles are independent -> megacore-shardable on v7x.
            dimension_semantics=("parallel",),
        ),
        cost_estimate=pl.CostEstimate(
            flops=flops, transcendentals=0, bytes_accessed=bytes_accessed),
    )(xp, packed["w1"], packed["b1"], packed["w2"], packed["b2"],
      packed["w3"], packed["b3"])

    return out_padded[:B, :out_size]


# ---------------------------------------------------------------------------
# Reference (same bf16-weight / f32-accumulate numerics as the kernel)
# ---------------------------------------------------------------------------
def qnet_reference(x, packed):
    in_size, in_pad, out_size = packed["in_size"], packed["in_pad"], packed["out_size"]
    wdt = packed["w1"].dtype
    xp = jnp.zeros((x.shape[0], in_pad), wdt).at[:, :in_size].set(x.astype(wdt))
    h1 = jnp.maximum(
        jnp.dot(xp, packed["w1"], preferred_element_type=jnp.float32) + packed["b1"], 0.0)
    h2 = jnp.maximum(
        jnp.dot(h1.astype(wdt), packed["w2"], preferred_element_type=jnp.float32)
        + packed["b2"], 0.0)
    out = (jnp.dot(h2.astype(wdt), packed["w3"], preferred_element_type=jnp.float32)
           + packed["b3"])
    return out[:, :out_size]


# TODO(synk): sample_action / train (epsilon-greedy + DDQN update) are host-side
# control flow + optimizer logic, intentionally not part of this forward kernel.

if __name__ == "__main__":
    # CartPole: observation dim = 4, actions = 2 (LEFT/RIGHT); batch = 32
    # (matches Config1.batch_size).
    B, INPUT_SIZE, OUTPUT_SIZE = 32, 4, 2

    key = jax.random.PRNGKey(0)
    k_params, k_x = jax.random.split(key)
    params_f32 = init_qnet_params(k_params, INPUT_SIZE, OUTPUT_SIZE)
    packed = pack_qnet_params(params_f32)
    x = jax.random.normal(k_x, (B, INPUT_SIZE), jnp.float32)

    out = qnet_forward(x, packed)
    out = jax.block_until_ready(out)

    ref = qnet_reference(x, packed)
    assert out.shape == (B, OUTPUT_SIZE)
    np.testing.assert_allclose(np.asarray(out), np.asarray(ref), rtol=1e-3, atol=1e-3)

    print("KERNEL_OK")
</pallas_src>

<mosaic_0001>
module attributes {stable_mosaic.version = 11 : i64} {
  func.func @qnet_kernel(%arg0: i32, %arg1: memref<32x8xbf16, #tpu.memory_space<vmem>>, %arg2: memref<8x128xbf16, #tpu.memory_space<vmem>>, %arg3: memref<1x128xf32, #tpu.memory_space<vmem>>, %arg4: memref<128x128xbf16, #tpu.memory_space<vmem>>, %arg5: memref<1x128xf32, #tpu.memory_space<vmem>>, %arg6: memref<128x128xbf16, #tpu.memory_space<vmem>>, %arg7: memref<1x128xf32, #tpu.memory_space<vmem>>, %arg8: memref<32x128xf32, #tpu.memory_space<vmem>>) attributes {dimension_semantics = [#tpu.dimension_semantics<parallel>], iteration_bounds = array<i64: 1>, scalar_prefetch = 0 : i64, scratch_operands = 0 : i64, tpu.core_type = #tpu.core_type<tc>, window_params = [{transform_indices = @transform_0, window_bounds = array<i64: 32, 8>}, {pipeline_mode = #tpu.pipeline_mode<synchronous>, transform_indices = @transform_1, window_bounds = array<i64: 8, 128>}, {pipeline_mode = #tpu.pipeline_mode<synchronous>, transform_indices = @transform_2, window_bounds = array<i64: 1, 128>}, {pipeline_mode = #tpu.pipeline_mode<synchronous>, transform_indices = @transform_3, window_bounds = array<i64: 128, 128>}, {pipeline_mode = #tpu.pipeline_mode<synchronous>, transform_indices = @transform_4, window_bounds = array<i64: 1, 128>}, {pipeline_mode = #tpu.pipeline_mode<synchronous>, transform_indices = @transform_5, window_bounds = array<i64: 128, 128>}, {pipeline_mode = #tpu.pipeline_mode<synchronous>, transform_indices = @transform_6, window_bounds = array<i64: 1, 128>}, {transform_indices = @transform_7, window_bounds = array<i64: 32, 128>}]} {
    %c0 = arith.constant 0 : index
    %c0_0 = arith.constant 0 : index
    %0 = vector.load %arg1[%c0, %c0_0] : memref<32x8xbf16, #tpu.memory_space<vmem>>, vector<32x8xbf16>
    %c0_1 = arith.constant 0 : index
    %c0_2 = arith.constant 0 : index
    %1 = vector.load %arg2[%c0_1, %c0_2] : memref<8x128xbf16, #tpu.memory_space<vmem>>, vector<8x128xbf16>
    %cst = arith.constant dense<0.000000e+00> : vector<32x128xf32>
    %2 = tpu.matmul %0, %1, %cst {dimension_numbers = #tpu.dot_dimension_numbers<[1], [0], [0], [1], [0, 0, 1, 1], [], []>} : vector<32x8xbf16>, vector<8x128xbf16>, vector<32x128xf32> -> vector<32x128xf32>
    %c0_3 = arith.constant 0 : index
    %c0_4 = arith.constant 0 : index
    %3 = vector.load %arg3[%c0_3, %c0_4] : memref<1x128xf32, #tpu.memory_space<vmem>>, vector<1x128xf32>
    %4 = vector.broadcast %3 : vector<1x128xf32> to vector<32x128xf32>
    %5 = arith.addf %2, %4 : vector<32x128xf32>
    %cst_5 = arith.constant 0.000000e+00 : f32
    %6 = vector.broadcast %cst_5 : f32 to vector<32x128xf32>
    %7 = arith.maximumf %5, %6 : vector<32x128xf32>
    %8 = arith.truncf %7 : vector<32x128xf32> to vector<32x128xbf16>
    %c0_6 = arith.constant 0 : index
    %c0_7 = arith.constant 0 : index
    %9 = vector.load %arg4[%c0_6, %c0_7] : memref<128x128xbf16, #tpu.memory_space<vmem>>, vector<128x128xbf16>
    %cst_8 = arith.constant dense<0.000000e+00> : vector<32x128xf32>
    %10 = tpu.matmul %8, %9, %cst_8 {dimension_numbers = #tpu.dot_dimension_numbers<[1], [0], [0], [1], [0, 0, 1, 1], [], []>} : vector<32x128xbf16>, vector<128x128xbf16>, vector<32x128xf32> -> vector<32x128xf32>
    %c0_9 = arith.constant 0 : index
    %c0_10 = arith.constant 0 : index
    %11 = vector.load %arg5[%c0_9, %c0_10] : memref<1x128xf32, #tpu.memory_space<vmem>>, vector<1x128xf32>
    %12 = vector.broadcast %11 : vector<1x128xf32> to vector<32x128xf32>
    %13 = arith.addf %10, %12 : vector<32x128xf32>
    %cst_11 = arith.constant 0.000000e+00 : f32
    %14 = vector.broadcast %cst_11 : f32 to vector<32x128xf32>
    %15 = arith.maximumf %13, %14 : vector<32x128xf32>
    %16 = arith.truncf %15 : vector<32x128xf32> to vector<32x128xbf16>
    %c0_12 = arith.constant 0 : index
    %c0_13 = arith.constant 0 : index
    %17 = vector.load %arg6[%c0_12, %c0_13] : memref<128x128xbf16, #tpu.memory_space<vmem>>, vector<128x128xbf16>
    %cst_14 = arith.constant dense<0.000000e+00> : vector<32x128xf32>
    %18 = tpu.matmul %16, %17, %cst_14 {dimension_numbers = #tpu.dot_dimension_numbers<[1], [0], [0], [1], [0, 0, 1, 1], [], []>} : vector<32x128xbf16>, vector<128x128xbf16>, vector<32x128xf32> -> vector<32x128xf32>
    %c0_15 = arith.constant 0 : index
    %c0_16 = arith.constant 0 : index
    %19 = vector.load %arg7[%c0_15, %c0_16] : memref<1x128xf32, #tpu.memory_space<vmem>>, vector<1x128xf32>
    %20 = vector.broadcast %19 : vector<1x128xf32> to vector<32x128xf32>
    %21 = arith.addf %18, %20 : vector<32x128xf32>
    %c0_17 = arith.constant 0 : index
    %c0_18 = arith.constant 0 : index
    %22 = vector.load %arg8[%c0_17, %c0_18] : memref<32x128xf32, #tpu.memory_space<vmem>>, vector<32x128xf32>
    tpu.vector_store %arg8[%c0_17, %c0_18], %21 {strides = array<i32>} : memref<32x128xf32, #tpu.memory_space<vmem>>, vector<32x128xf32>,
    return
  }
  func.func @transform_0(%arg0: i32) -> (i32, i32) {
    %c0_i32 = arith.constant 0 : i32
    %c0_i32_0 = arith.constant 0 : i32
    return %arg0, %c0_i32 : i32, i32
  }
  func.func @transform_1(%arg0: i32) -> (i32, i32) {
    %c0_i32 = arith.constant 0 : i32
    %c0_i32_0 = arith.constant 0 : i32
    %c0_i32_1 = arith.constant 0 : i32
    return %c0_i32, %c0_i32_0 : i32, i32
  }
  func.func @transform_2(%arg0: i32) -> (i32, i32) {
    %c0_i32 = arith.constant 0 : i32
    %c0_i32_0 = arith.constant 0 : i32
    %c0_i32_1 = arith.constant 0 : i32
    return %c0_i32, %c0_i32_0 : i32, i32
  }
  func.func @transform_3(%arg0: i32) -> (i32, i32) {
    %c0_i32 = arith.constant 0 : i32
    %c0_i32_0 = arith.constant 0 : i32
    %c0_i32_1 = arith.constant 0 : i32
    return %c0_i32, %c0_i32_0 : i32, i32
  }
  func.func @transform_4(%arg0: i32) -> (i32, i32) {
    %c0_i32 = arith.constant 0 : i32
    %c0_i32_0 = arith.constant 0 : i32
    %c0_i32_1 = arith.constant 0 : i32
    return %c0_i32, %c0_i32_0 : i32, i32
  }
  func.func @transform_5(%arg0: i32) -> (i32, i32) {
    %c0_i32 = arith.constant 0 : i32
    %c0_i32_0 = arith.constant 0 : i32
    %c0_i32_1 = arith.constant 0 : i32
    return %c0_i32, %c0_i32_0 : i32, i32
  }
  func.func @transform_6(%arg0: i32) -> (i32, i32) {
    %c0_i32 = arith.constant 0 : i32
    %c0_i32_0 = arith.constant 0 : i32
    %c0_i32_1 = arith.constant 0 : i32
    return %c0_i32, %c0_i32_0 : i32, i32
  }
  func.func @transform_7(%arg0: i32) -> (i32, i32) {
    %c0_i32 = arith.constant 0 : i32
    %c0_i32_0 = arith.constant 0 : i32
    return %arg0, %c0_i32 : i32, i32
  }
}

</mosaic_0001>

<llo_original>
// kernel: tpu_custom_call.1
$region0: #{tpu_custom_call.1}
  #allocation0 [shape = 'u32[]', space=smem, size = 0x4, offset = 0x4, fixed_abs, tag = 'smem constant byte address 0x4 - core index']
  #allocation1 [shape = 'u32[144,128]{1,0:T(1,128)}', space=vmem, size = 0x12000, scoped, tag = 'internal scratch']
  %s0 = inlined_call_operand.vmem [shape: bf16[32,8], index: 0, kind: input, shape index: {}]
  %s1 = inlined_call_operand.vmem [shape: bf16[8,128], index: 1, kind: input, shape index: {}]
  %s2 = inlined_call_operand.vmem [shape: f32[1,128], index: 2, kind: input, shape index: {}]
  %s3 = inlined_call_operand.hbm [shape: bf16[128,128], index: 3, kind: input, shape index: {}]
  %s4 = inlined_call_operand.vmem [shape: f32[1,128], index: 4, kind: input, shape index: {}]
  %s5 = inlined_call_operand.hbm [shape: bf16[128,128], index: 5, kind: input, shape index: {}]
  %s6 = inlined_call_operand.vmem [shape: f32[1,128], index: 6, kind: input, shape index: {}]
  %s7 = inlined_call_operand.hbm [shape: f32[32,128], index: 7, kind: output, shape index: {}]
  %s8 = sld [smem:[#allocation0]]
  $region46: #{tpu_custom_call.1} parent=0
    _
  %s10 = ssub.s32 1, %s8
  %s11 = scalar_select 0, %s10, %s8
  $region1: #{tpu_custom_call.1} parent=0
    #allocation2 [shape = 'u8[32768]{0}', space=vmem, size = 0x8000, scoped, tag = 'input window, operand 3, single buffered']
    #allocation3 [shape = 's32[1]{0}', space=sflag, size = 0x4, scoped, tag = 'scoped memory for tpu_custom_call.1']
    #allocation4 [shape = 's32[1]{0}', space=sflag, size = 0x4, scoped, tag = 'scoped memory for tpu_custom_call.1']
    #allocation5 [shape = 'u8[32768]{0}', space=vmem, size = 0x8000, scoped, tag = 'input window, operand 5, single buffered']
    #allocation6 [shape = 's32[1]{0}', space=sflag, size = 0x4, scoped, tag = 'scoped memory for tpu_custom_call.1']
    #allocation7 [shape = 'u8[16384]{0}', space=vmem, size = 0x4000, scoped, tag = 'output window, operand 0, single buffered']
    %12 = vsyncpa [#allocation3], 0
    %13 = vsyncpa [#allocation6], 0
    %14 = vsyncpa [#allocation4], 0
    // Predicated region
    $region2: #{tpu_custom_call.1} parent=1 // pred_check
      _
    $region3: #{tpu_custom_call.1} parent=1 // pred_check_branch
      %16 = sbr.rel (0) target = $region5
    $region4: #{tpu_custom_call.1} parent=1 // pred_region
      _
    $region5: #{tpu_custom_call.1} parent=1 // pred_fallthru
      _
    // Predicated region
    $region6: #{tpu_custom_call.1} parent=1 // pred_check
      _
    $region7: #{tpu_custom_call.1} parent=1 // pred_check_branch
      %18 = sbr.rel (0) target = $region9
    $region8: #{tpu_custom_call.1} parent=1 // pred_region
      _
    $region9: #{tpu_custom_call.1} parent=1 // pred_fallthru
      _
    // Predicated region
    $region10: #{tpu_custom_call.1} parent=1 // pred_check
      _
    $region11: #{tpu_custom_call.1} parent=1 // pred_check_branch
      %20 = sbr.rel (0) target = $region13
    $region12: #{tpu_custom_call.1} parent=1 // pred_region
      _
    $region13: #{tpu_custom_call.1} parent=1 // pred_fallthru
      _
    // Predicated region
    $region14: #{tpu_custom_call.1} parent=1 // pred_check
      _
    $region15: #{tpu_custom_call.1} parent=1 // pred_check_branch
      %22 = sbr.rel (0) target = $region17
    $region16: #{tpu_custom_call.1} parent=1 // pred_region
      %s24 = ssub.s32 1024, 1024
      %25 = vsyncadd [#allocation3], %s24
      %s26 = sshll.u32 [#allocation2], 4
      %s27 = int_to_ptr.vmem [resolvable:$true] %s26
      %32 = dma.hbm_to_vmem [thread:$0]  %s3, 1024, %s27, [#allocation3], 64, 64, 4
    $region17: #{tpu_custom_call.1} parent=1 // pred_fallthru
      _
    // Predicated region
    $region18: #{tpu_custom_call.1} parent=1 // pred_check
      _
    $region19: #{tpu_custom_call.1} parent=1 // pred_check_branch
      %34 = sbr.rel (0) target = $region21
    $region20: #{tpu_custom_call.1} parent=1 // pred_region
      _
    $region21: #{tpu_custom_call.1} parent=1 // pred_fallthru
      _
    // Predicated region
    $region22: #{tpu_custom_call.1} parent=1 // pred_check
      _
    $region23: #{tpu_custom_call.1} parent=1 // pred_check_branch
      %36 = sbr.rel (0) target = $region25
    $region24: #{tpu_custom_call.1} parent=1 // pred_region
      %s38 = ssub.s32 1024, 1024
      %39 = vsyncadd [#allocation6], %s38
      %s40 = sshll.u32 [#allocation5], 4
      %s41 = int_to_ptr.vmem [resolvable:$true] %s40
      %46 = dma.hbm_to_vmem [thread:$0]  %s5, 1024, %s41, [#allocation6], 64, 64, 4
    $region25: #{tpu_custom_call.1} parent=1 // pred_fallthru
      _
    // Predicated region
    $region26: #{tpu_custom_call.1} parent=1 // pred_check
      _
    $region27: #{tpu_custom_call.1} parent=1 // pred_check_branch
      %48 = sbr.rel (0) target = $region29
    $region28: #{tpu_custom_call.1} parent=1 // pred_region
      _
    $region29: #{tpu_custom_call.1} parent=1 // pred_fallthru
      _
    // Predicated region
    $region30: #{tpu_custom_call.1} parent=1 // pred_check
      _
    $region31: #{tpu_custom_call.1} parent=1 // pred_check_branch
      %50 = sbr.rel (0) target = $region33
    $region32: #{tpu_custom_call.1} parent=1 // pred_region
      %51 = dma.done [#allocation3], 1024
    $region33: #{tpu_custom_call.1} parent=1 // pred_fallthru
      _
    // Predicated region
    $region34: #{tpu_custom_call.1} parent=1 // pred_check
      _
    $region35: #{tpu_custom_call.1} parent=1 // pred_check_branch
      %53 = sbr.rel (0) target = $region37
    $region36: #{tpu_custom_call.1} parent=1 // pred_region
      %54 = dma.done [#allocation6], 1024
    $region37: #{tpu_custom_call.1} parent=1 // pred_fallthru
      _
    %v56 = vld [vmem:[%s0] sm:$0xf]
    %v57 = vld [vmem:[%s0 + $0x4] sm:$0xf]
    %v58 = vld [vmem:[%s0 + $0x8] sm:$0xf]
    %v59 = vld [vmem:[%s0 + $0xc] sm:$0xf]
    %v60 = vld [vmem:[%s1] sm:$0xf]
    %v61 = vld [vmem:[%s2] sm:$0x1]
    %v63 = vlaneseq
    %v64 = vshrl.u32 %v63, 7
    %v65 = vsub.s32 0, %v64
    %v66 = vrot.slane %v61, %v65
    %v72 = vunpack.c.l.b16 %v56
    %v73 = vunpack.c.l.b16 %v57
    %v74 = vunpack.c.l.b16 %v58
    %v75 = vunpack.c.l.b16 %v59
    %v76 = vpack.c.b16 %v73, %v72
    %v77 = vpack.c.b16 %v75, %v74
    %vm78 = vcmask 64512
    %v80 = vsel %vm78, %v76, 0
    %v83 = vsel %vm78, %v77, 0
    %vm85 = vcmask 1043456
    %v87 = vsel %vm85, %v60, 0
    %89 = vmatprep.subr.bf16.mxu0 0
    %90 = vmatpush1.bf16.msra.mxu0 %v87
    %91 = vmatprep.subr.bf16.mxu0 0
    %92 = vmatpush1.bf16.msra.mxu0 0
    %93 = vmatprep.subr.bf16.mxu0 0
    %94 = vmatpush1.bf16.msra.mxu0 0
    %95 = vmatprep.subr.bf16.mxu0 0
    %96 = vmatpush1.bf16.msra.mxu0 0
    %97 = vmatprep.subr.bf16.mxu0 0
    %98 = vmatpush1.bf16.msra.mxu0 0
    %99 = vmatprep.subr.bf16.mxu0 0
    %100 = vmatpush1.bf16.msra.mxu0 0
    %101 = vmatprep.subr.bf16.mxu0 0
    %102 = vmatpush1.bf16.msra.mxu0 0
    %103 = vmatprep.subr.bf16.mxu0 0
    %104 = vmatpush1.bf16.msra.mxu0 0
    %105 = vmatprep.subr.bf16.mxu0 0
    %106 = vmatpush1.bf16.msra.mxu0 0
    %107 = vmatprep.subr.bf16.mxu0 0
    %108 = vmatpush1.bf16.msra.mxu0 0
    %109 = vmatprep.subr.bf16.mxu0 0
    %110 = vmatpush1.bf16.msra.mxu0 0
    %111 = vmatprep.subr.bf16.mxu0 0
    %112 = vmatpush1.bf16.msra.mxu0 0
    %113 = vmatprep.subr.bf16.mxu0 0
    %114 = vmatpush1.bf16.msra.mxu0 0
    %115 = vmatprep.subr.bf16.mxu0 0
    %116 = vmatpush1.bf16.msra.mxu0 0
    %117 = vmatprep.subr.bf16.mxu0 0
    %118 = vmatpush1.bf16.msra.mxu0 0
    %119 = vmatprep.subr.bf16.mxu0 0
    %120 = vmatpush1.bf16.msra.mxu0 0
    %121 = vmatprep.mubr.bf16.mxu0 0
    %122 = vmatmul.mubr.bf16.gmra.mrb[0].mxu0 %v80
    %v123 = vpop.f32.mrb[0].mxu0
    %v124 = vadd.f32 %v66, %v123
    %v125 = vpop.f32.mrb[0].mxu0
    %v126 = vpop.f32.mrb[0].mxu0
    %v127 = vadd.f32 %v66, %v126
    %v128 = vpop.f32.mrb[0].mxu0
    %129 = vmatprep.mubr.bf16.mxu0 0
    %130 = vmatmul.mubr.bf16.gmra.mrb[0].mxu0 %v83
    %v131 = vpop.f32.mrb[0].mxu0
    %v132 = vadd.f32 %v66, %v131
    %v133 = vpop.f32.mrb[0].mxu0
    %v134 = vpop.f32.mrb[0].mxu0
    %v135 = vadd.f32 %v66, %v134
    %v136 = vpop.f32.mrb[0].mxu0
    %137 = vdwg.mxu0
    %v138 = vmax.f32 %v124, 0.0
    %v139 = vmax.f32 %v127, 0.0
    %v140 = vmax.f32 %v132, 0.0
    %v141 = vmax.f32 %v135, 0.0
    %v142 = vpack.c.bf16 %v139, %v138
    %v143 = vpack.c.bf16 %v141, %v140
    %v144 = vld [vmem:[#allocation2] sm:$0xf]
    %v145 = vld [vmem:[#allocation2 + $0x4] sm:$0xf]
    %v146 = vld [vmem:[#allocation2 + $0x8] sm:$0xf]
    %v147 = vld [vmem:[#allocation2 + $0xc] sm:$0xf]
    %v148 = vld [vmem:[#allocation2 + $0x10] sm:$0xf]
    %v149 = vld [vmem:[#allocation2 + $0x14] sm:$0xf]
    %v150 = vld [vmem:[#allocation2 + $0x18] sm:$0xf]
    %v151 = vld [vmem:[#allocation2 + $0x1c] sm:$0xf]
    %v152 = vld [vmem:[#allocation2 + $0x20] sm:$0xf]
    %v153 = vld [vmem:[#allocation2 + $0x24] sm:$0xf]
    %v154 = vld [vmem:[#allocation2 + $0x28] sm:$0xf]
    %v155 = vld [vmem:[#allocation2 + $0x2c] sm:$0xf]
    %v156 = vld [vmem:[#allocation2 + $0x30] sm:$0xf]
    %v157 = vld [vmem:[#allocation2 + $0x34] sm:$0xf]
    %v158 = vld [vmem:[#allocation2 + $0x38] sm:$0xf]
    %v159 = vld [vmem:[#allocation2 + $0x3c] sm:$0xf]
    %v160 = vld [vmem:[%s4] sm:$0x1]
    %v162 = vlaneseq
    %v163 = vshrl.u32 %v162, 7
    %v164 = vsub.s32 0, %v163
    %v165 = vrot.slane %v160, %v164
    %v183 = vunpack.c.l.b16 %v144
    %v184 = vunpack.c.l.b16 %v145
    %v185 = vunpack.c.l.b16 %v146
    %v186 = vunpack.c.l.b16 %v147
    %v187 = vunpack.c.l.b16 %v148
    %v188 = vunpack.c.l.b16 %v149
    %v189 = vunpack.c.l.b16 %v150
    %v190 = vunpack.c.l.b16 %v151
    %v191 = vunpack.c.l.b16 %v152
    %v192 = vunpack.c.l.b16 %v153
    %v193 = vunpack.c.l.b16 %v154
    %v194 = vunpack.c.l.b16 %v155
    %v195 = vunpack.c.l.b16 %v156
    %v196 = vunpack.c.l.b16 %v157
    %v197 = vunpack.c.l.b16 %v158
    %v198 = vunpack.c.l.b16 %v159
    %v199 = vpack.c.b16 %v184, %v183
    %v200 = vpack.c.b16 %v186, %v185
    %v201 = vpack.c.b16 %v188, %v187
    %v202 = vpack.c.b16 %v190, %v189
    %v203 = vpack.c.b16 %v192, %v191
    %v204 = vpack.c.b16 %v194, %v193
    %v205 = vpack.c.b16 %v196, %v195
    %v206 = vpack.c.b16 %v198, %v197
    %215 = vmatprep.subr.bf16.mxu0 0
    %216 = vmatpush1.bf16.msra.mxu0 %v199
    %217 = vmatprep.subr.bf16.mxu0 0
    %218 = vmatpush1.bf16.msra.mxu0 %v200
    %219 = vmatprep.subr.bf16.mxu0 0
    %220 = vmatpush1.bf16.msra.mxu0 %v201
    %221 = vmatprep.subr.bf16.mxu0 0
    %222 = vmatpush1.bf16.msra.mxu0 %v202
    %223 = vmatprep.subr.bf16.mxu0 0
    %224 = vmatpush1.bf16.msra.mxu0 %v203
    %225 = vmatprep.subr.bf16.mxu0 0
    %226 = vmatpush1.bf16.msra.mxu0 %v204
    %227 = vmatprep.subr.bf16.mxu0 0
    %228 = vmatpush1.bf16.msra.mxu0 %v205
    %229 = vmatprep.subr.bf16.mxu0 0
    %230 = vmatpush1.bf16.msra.mxu0 %v206
    %231 = vmatprep.subr.bf16.mxu0 0
    %232 = vmatpush1.bf16.msra.mxu0 0
    %233 = vmatprep.subr.bf16.mxu0 0
    %234 = vmatpush1.bf16.msra.mxu0 0
    %235 = vmatprep.subr.bf16.mxu0 0
    %236 = vmatpush1.bf16.msra.mxu0 0
    %237 = vmatprep.subr.bf16.mxu0 0
    %238 = vmatpush1.bf16.msra.mxu0 0
    %239 = vmatprep.subr.bf16.mxu0 0
    %240 = vmatpush1.bf16.msra.mxu0 0
    %241 = vmatprep.subr.bf16.mxu0 0
    %242 = vmatpush1.bf16.msra.mxu0 0
    %243 = vmatprep.subr.bf16.mxu0 0
    %244 = vmatpush1.bf16.msra.mxu0 0
    %245 = vmatprep.subr.bf16.mxu0 0
    %246 = vmatpush1.bf16.msra.mxu0 0
    %247 = vmatprep.mubr.bf16.mxu0 0
    %248 = vmatmul.mubr.bf16.gmra.mrb[0].mxu0 %v142
    %v249 = vpop.f32.mrb[0].mxu0
    %v250 = vadd.f32 %v165, %v249
    %v251 = vpop.f32.mrb[0].mxu0
    %v252 = vpop.f32.mrb[0].mxu0
    %v253 = vadd.f32 %v165, %v252
    %v254 = vpop.f32.mrb[0].mxu0
    %255 = vmatprep.mubr.bf16.mxu0 0
    %256 = vmatmul.mubr.bf16.gmra.mrb[0].mxu0 %v143
    %v257 = vpop.f32.mrb[0].mxu0
    %v258 = vadd.f32 %v165, %v257
    %v259 = vpop.f32.mrb[0].mxu0
    %v260 = vpop.f32.mrb[0].mxu0
    %v261 = vadd.f32 %v165, %v260
    %v262 = vpop.f32.mrb[0].mxu0
    %263 = vdwg.mxu0
    %v264 = vmax.f32 %v250, 0.0
    %v265 = vmax.f32 %v253, 0.0
    %v266 = vmax.f32 %v258, 0.0
    %v267 = vmax.f32 %v261, 0.0
    %v268 = vpack.c.bf16 %v265, %v264
    %v269 = vpack.c.bf16 %v267, %v266
    %v270 = vld [vmem:[#allocation5] sm:$0xf]
    %v271 = vld [vmem:[#allocation5 + $0x4] sm:$0xf]
    %v272 = vld [vmem:[#allocation5 + $0x8] sm:$0xf]
    %v273 = vld [vmem:[#allocation5 + $0xc] sm:$0xf]
    %v274 = vld [vmem:[#allocation5 + $0x10] sm:$0xf]
    %v275 = vld [vmem:[#allocation5 + $0x14] sm:$0xf]
    %v276 = vld [vmem:[#allocation5 + $0x18] sm:$0xf]
    %v277 = vld [vmem:[#allocation5 + $0x1c] sm:$0xf]
    %v278 = vld [vmem:[#allocation5 + $0x20] sm:$0xf]
    %v279 = vld [vmem:[#allocation5 + $0x24] sm:$0xf]
    %v280 = vld [vmem:[#allocation5 + $0x28] sm:$0xf]
    %v281 = vld [vmem:[#allocation5 + $0x2c] sm:$0xf]
    %v282 = vld [vmem:[#allocation5 + $0x30] sm:$0xf]
    %v283 = vld [vmem:[#allocation5 + $0x34] sm:$0xf]
    %v284 = vld [vmem:[#allocation5 + $0x38] sm:$0xf]
    %v285 = vld [vmem:[#allocation5 + $0x3c] sm:$0xf]
    %v286 = vld [vmem:[%s6] sm:$0x1]
    %v288 = vlaneseq
    %v289 = vshrl.u32 %v288, 7
    %v290 = vsub.s32 0, %v289
    %v291 = vrot.slane %v286, %v290
    %v309 = vunpack.c.l.b16 %v270
    %v310 = vunpack.c.l.b16 %v271
    %v311 = vunpack.c.l.b16 %v272
    %v312 = vunpack.c.l.b16 %v273
    %v313 = vunpack.c.l.b16 %v274
    %v314 = vunpack.c.l.b16 %v275
    %v315 = vunpack.c.l.b16 %v276
    %v316 = vunpack.c.l.b16 %v277
    %v317 = vunpack.c.l.b16 %v278
    %v318 = vunpack.c.l.b16 %v279
    %v319 = vunpack.c.l.b16 %v280
    %v320 = vunpack.c.l.b16 %v281
    %v321 = vunpack.c.l.b16 %v282
    %v322 = vunpack.c.l.b16 %v283
    %v323 = vunpack.c.l.b16 %v284
    %v324 = vunpack.c.l.b16 %v285
    %v325 = vpack.c.b16 %v310, %v309
    %v326 = vpack.c.b16 %v312, %v311
    %v327 = vpack.c.b16 %v314, %v313
    %v328 = vpack.c.b16 %v316, %v315
    %v329 = vpack.c.b16 %v318, %v317
    %v330 = vpack.c.b16 %v320, %v319
    %v331 = vpack.c.b16 %v322, %v321
    %v332 = vpack.c.b16 %v324, %v323
    %341 = vmatprep.subr.bf16.mxu0 0
    %342 = vmatpush1.bf16.msra.mxu0 %v325
    %343 = vmatprep.subr.bf16.mxu0 0
    %344 = vmatpush1.bf16.msra.mxu0 %v326
    %345 = vmatprep.subr.bf16.mxu0 0
    %346 = vmatpush1.bf16.msra.mxu0 %v327
    %347 = vmatprep.subr.bf16.mxu0 0
    %348 = vmatpush1.bf16.msra.mxu0 %v328
    %349 = vmatprep.subr.bf16.mxu0 0
    %350 = vmatpush1.bf16.msra.mxu0 %v329
    %351 = vmatprep.subr.bf16.mxu0 0
    %352 = vmatpush1.bf16.msra.mxu0 %v330
    %353 = vmatprep.subr.bf16.mxu0 0
    %354 = vmatpush1.bf16.msra.mxu0 %v331
    %355 = vmatprep.subr.bf16.mxu0 0
    %356 = vmatpush1.bf16.msra.mxu0 %v332
    %357 = vmatprep.subr.bf16.mxu0 0
    %358 = vmatpush1.bf16.msra.mxu0 0
    %359 = vmatprep.subr.bf16.mxu0 0
    %360 = vmatpush1.bf16.msra.mxu0 0
    %361 = vmatprep.subr.bf16.mxu0 0
    %362 = vmatpush1.bf16.msra.mxu0 0
    %363 = vmatprep.subr.bf16.mxu0 0
    %364 = vmatpush1.bf16.msra.mxu0 0
    %365 = vmatprep.subr.bf16.mxu0 0
    %366 = vmatpush1.bf16.msra.mxu0 0
    %367 = vmatprep.subr.bf16.mxu0 0
    %368 = vmatpush1.bf16.msra.mxu0 0
    %369 = vmatprep.subr.bf16.mxu0 0
    %370 = vmatpush1.bf16.msra.mxu0 0
    %371 = vmatprep.subr.bf16.mxu0 0
    %372 = vmatpush1.bf16.msra.mxu0 0
    %373 = vmatprep.mubr.bf16.mxu0 0
    %374 = vmatmul.mubr.bf16.gmra.mrb[0].mxu0 %v268
    %v375 = vpop.f32.mrb[0].mxu0
    %v376 = vadd.f32 %v291, %v375
    %v377 = vpop.f32.mrb[0].mxu0
    %v378 = vpop.f32.mrb[0].mxu0
    %v379 = vadd.f32 %v291, %v378
    %v380 = vpop.f32.mrb[0].mxu0
    %381 = vmatprep.mubr.bf16.mxu0 0
    %382 = vmatmul.mubr.bf16.gmra.mrb[0].mxu0 %v269
    %v383 = vpop.f32.mrb[0].mxu0
    %v384 = vadd.f32 %v291, %v383
    %v385 = vpop.f32.mrb[0].mxu0
    %v386 = vpop.f32.mrb[0].mxu0
    %v387 = vadd.f32 %v291, %v386
    %v388 = vpop.f32.mrb[0].mxu0
    %389 = vdwg.mxu0
    %390 = vst [vmem:[#allocation7] sm:$0xff] %v376
    %391 = vst [vmem:[#allocation7 + $0x8] sm:$0xff] %v379
    %392 = vst [vmem:[#allocation7 + $0x10] sm:$0xff] %v384
    %393 = vst [vmem:[#allocation7 + $0x18] sm:$0xff] %v387
    // Predicated region
    $region38: #{tpu_custom_call.1} parent=1 // pred_check
      _
    $region39: #{tpu_custom_call.1} parent=1 // pred_check_branch
      %395 = sbr.rel (0) target = $region41
    $region40: #{tpu_custom_call.1} parent=1 // pred_region
      %s397 = ssub.s32 512, 512
      %398 = vsyncadd [#allocation4], %s397
      %s399 = sshll.u32 [#allocation7], 4
      %s400 = int_to_ptr.vmem [resolvable:$true] %s399
      %405 = dma.vmem_to_hbm [thread:$0]  %s400, 512, %s7, [#allocation4], 128, 128, 8
    $region41: #{tpu_custom_call.1} parent=1 // pred_fallthru
      _
    // Predicated region
    $region42: #{tpu_custom_call.1} parent=1 // pred_check
      _
    $region43: #{tpu_custom_call.1} parent=1 // pred_check_branch
      %407 = sbr.rel (0) target = $region45
    $region44: #{tpu_custom_call.1} parent=1 // pred_region
      %408 = dma.done [#allocation4], 512
    $region45: #{tpu_custom_call.1} parent=1 // pred_fallthru
      _
    %409 = vsyncpa [#allocation3], 1
    %410 = vsyncpa [#allocation6], 1
    %411 = vsyncpa [#allocation4], 1

</llo_original>
